<compile_context>
chip_gen: v7x
topology: tpu7x:2x2x1
jax: 0.10.0
libtpu: 0.0.40
codegen_flags: <defaults>
</compile_context>

<pallas_src>
import functools

import jax
import jax.numpy as jnp
from jax.experimental import pallas as pl
from jax.experimental.pallas import tpu as pltpu


def _round_up(x, m):
    return ((x + m - 1) // m) * m


def dueling_q_kernel(action_size,
                     state_ref, w1_ref, b1_ref, w2_ref, b2_ref,
                     wva_ref, bva_ref, wh_ref, bh_ref,
                     q_ref):
    """One batch tile of the full forward pass (4 fused matmuls)."""
    wdt = w1_ref.dtype  # MXU operand dtype (f32 or bf16); accumulation is f32.

    # feature trunk
    x = jnp.dot(state_ref[...], w1_ref[...], preferred_element_type=jnp.float32)
    x = jnp.maximum(x + b1_ref[...], 0.0)                         # relu(feature_fc1)
    feat = jnp.dot(x.astype(wdt), w2_ref[...], preferred_element_type=jnp.float32)
    feat = jnp.maximum(feat + b2_ref[...], 0.0)                   # relu(feature_fc2)

    # fused value|advantage hidden layer: cols [0:64] = value stream,
    # cols [64:128] = advantage stream.
    va = jnp.dot(feat.astype(wdt), wva_ref[...], preferred_element_type=jnp.float32)
    va = jnp.maximum(va + bva_ref[...], 0.0)                      # relu(both fc1s)

    # fused block-diagonal head: col 0 = V, cols 1..A = advantages, rest = 0.
    head = jnp.dot(va.astype(wdt), wh_ref[...], preferred_element_type=jnp.float32)
    head = head + bh_ref[...]

    # dueling combine done on full 128-lane vregs (no narrow slices/stores).
    col = jax.lax.broadcasted_iota(jnp.int32, head.shape, 1)
    val_mask = (col == 0).astype(jnp.float32)
    adv_mask = jnp.logical_and(col >= 1, col < 1 + action_size).astype(jnp.float32)
    value = jnp.sum(head * val_mask, axis=-1, keepdims=True)          # (TB, 1)
    adv_mean = jnp.sum(head * adv_mask, axis=-1, keepdims=True) * (1.0 / action_size)

    # Lane-dense write; Q-values live in columns [1, 1+A) of the output block.
    q_ref[...] = value + head - adv_mean


def dueling_q_forward(state, params, *, batch_tile=512, compute_dtype=jnp.float32):
    """state: (B, state_size) f32. params: dict of (in, out) weights, (1, out) biases.

    compute_dtype=jnp.bfloat16 halves weight/activation MXU-operand bytes on
    v6e/v7x (elementwise math stays f32); default f32 matches the reference.
    """
    B, S = state.shape
    A = params["wa2"].shape[1]
    H256 = params["w1"].shape[1]      # 256
    F128 = params["w2"].shape[1]      # 128
    H64 = params["wv1"].shape[1]      # 64
    head_w = max(128, _round_up(1 + A, 128))   # lane-dense head / output width

    # ---- pack / pad parameters ------------------------------------------------
    w1 = params["w1"].astype(compute_dtype)
    b1 = params["b1"].astype(jnp.float32)
    w2 = params["w2"].astype(compute_dtype)
    b2 = params["b2"].astype(jnp.float32)

    # wva = [wv1 | wa1] : (128, 128);  bva = [bv1 | ba1] : (1, 128)
    wva = jnp.concatenate([params["wv1"], params["wa1"]], axis=1).astype(compute_dtype)
    bva = jnp.concatenate([params["bv1"], params["ba1"]], axis=1).astype(jnp.float32)

    # block-diagonal head: rows 0:64 feed col 0 (V), rows 64:128 feed cols 1..A.
    wh = jnp.zeros((2 * H64, head_w), jnp.float32)
    wh = wh.at[:H64, 0:1].set(params["wv2"])
    wh = wh.at[H64:, 1:1 + A].set(params["wa2"])
    wh = wh.astype(compute_dtype)
    bh = jnp.zeros((1, head_w), jnp.float32)
    bh = bh.at[:, 0:1].set(params["bv2"])
    bh = bh.at[:, 1:1 + A].set(params["ba2"])

    # ---- batch tiling ----------------------------------------------------------
    tb = min(_round_up(max(batch_tile, 8), 8), _round_up(max(B, 1), 8))
    padded_b = _round_up(max(B, 1), tb)
    state_p = state.astype(compute_dtype)
    if padded_b != B:
        state_p = jnp.pad(state_p, ((0, padded_b - B), (0, 0)))
    grid = (padded_b // tb,)

    def const_spec(shape):
        # weights/biases: full-array block, same index every grid step
        # -> DMA'd once and kept resident in VMEM across batch tiles.
        return pl.BlockSpec(shape, lambda i: (0, 0))

    flops = 2 * padded_b * (S * H256 + H256 * F128 + F128 * 2 * H64 + 2 * H64 * head_w)
    param_bytes = sum(int(x.size) * x.dtype.itemsize
                      for x in (w1, b1, w2, b2, wva, bva, wh, bh))
    bytes_accessed = param_bytes + padded_b * (S * state_p.dtype.itemsize + head_w * 4)

    q_padded = pl.pallas_call(
        functools.partial(dueling_q_kernel, A),
        out_shape=jax.ShapeDtypeStruct((padded_b, head_w), jnp.float32),
        grid=grid,
        in_specs=[
            pl.BlockSpec((tb, S), lambda i: (i, 0)),   # state: tiled over batch
            const_spec(w1.shape), const_spec(b1.shape),
            const_spec(w2.shape), const_spec(b2.shape),
            const_spec(wva.shape), const_spec(bva.shape),
            const_spec(wh.shape), const_spec(bh.shape),
        ],
        out_specs=pl.BlockSpec((tb, head_w), lambda i: (i, 0)),
        compiler_params=pltpu.CompilerParams(
            dimension_semantics=("parallel",)),
        cost_estimate=pl.CostEstimate(
            flops=flops, transcendentals=0, bytes_accessed=bytes_accessed),
    )(state_p, w1, b1, w2, b2, wva, bva, wh, bh)

    # Q-values are in columns [1, 1+A) of the lane-dense output block.
    return q_padded[:B, 1:1 + A]


def init_params(key, state_size, action_size):
    """Deterministic synthetic parameters (shapes match DuelingQNetwork.__init__)."""
    dims = {
        "w1": (state_size, 256), "b1": (1, 256),
        "w2": (256, 128),        "b2": (1, 128),
        "wv1": (128, 64),        "bv1": (1, 64),
        "wv2": (64, 1),          "bv2": (1, 1),
        "wa1": (128, 64),        "ba1": (1, 64),
        "wa2": (64, action_size), "ba2": (1, action_size),
    }
    params = {}
    for name, shape in dims.items():
        key, sub = jax.random.split(key)
        fan_in = shape[0] if name.startswith("w") else shape[1]
        scale = 1.0 / jnp.sqrt(jnp.float32(max(fan_in, 1)))
        params[name] = scale * jax.random.normal(sub, shape, dtype=jnp.float32)
    return params


def reference_forward(state, p):
    """Plain-JAX reference mirroring the PyTorch forward exactly."""
    x = jnp.maximum(state @ p["w1"] + p["b1"], 0.0)
    feat = jnp.maximum(x @ p["w2"] + p["b2"], 0.0)
    value = jnp.maximum(feat @ p["wv1"] + p["bv1"], 0.0) @ p["wv2"] + p["bv2"]
    adv = jnp.maximum(feat @ p["wa1"] + p["ba1"], 0.0) @ p["wa2"] + p["ba2"]
    return value + (adv - jnp.mean(adv, axis=1, keepdims=True))


if __name__ == "__main__":
    state_size = 8
    action_size = 4
    batch = 2

    key = jax.random.PRNGKey(0)
    key, k_state = jax.random.split(key)
    state = jax.random.normal(k_state, (batch, state_size), dtype=jnp.float32)
    params = init_params(key, state_size, action_size)

    # Small (action-selection sized) batch: single grid step.
    q = jax.block_until_ready(dueling_q_forward(state, params))
    q_ref = reference_forward(state, params)
    assert q.shape == (batch, action_size)
    assert jnp.allclose(q, q_ref, atol=1e-4, rtol=1e-4), "mismatch vs reference (small batch)"

    # Larger batch exercising the batch grid (3 tiles of 128 rows, with padding).
    key, k_big = jax.random.split(key)
    big_state = jax.random.normal(k_big, (300, state_size), dtype=jnp.float32)
    q_big = jax.block_until_ready(dueling_q_forward(big_state, params, batch_tile=128))
    q_big_ref = reference_forward(big_state, params)
    assert q_big.shape == (300, action_size)
    assert jnp.allclose(q_big, q_big_ref, atol=1e-4, rtol=1e-4), "mismatch vs reference (grid)"

    print("KERNEL_OK")
</pallas_src>

<mosaic_0001>
module attributes {stable_mosaic.version = 11 : i64} {
  func.func @dueling_q_kernel(%arg0: i32, %arg1: memref<8x8xf32, #tpu.memory_space<vmem>>, %arg2: memref<8x256xf32, #tpu.memory_space<vmem>>, %arg3: memref<1x256xf32, #tpu.memory_space<vmem>>, %arg4: memref<256x128xf32, #tpu.memory_space<vmem>>, %arg5: memref<1x128xf32, #tpu.memory_space<vmem>>, %arg6: memref<128x128xf32, #tpu.memory_space<vmem>>, %arg7: memref<1x128xf32, #tpu.memory_space<vmem>>, %arg8: memref<128x128xf32, #tpu.memory_space<vmem>>, %arg9: memref<1x128xf32, #tpu.memory_space<vmem>>, %arg10: memref<8x128xf32, #tpu.memory_space<vmem>>) attributes {dimension_semantics = [#tpu.dimension_semantics<parallel>], iteration_bounds = array<i64: 1>, scalar_prefetch = 0 : i64, scratch_operands = 0 : i64, tpu.core_type = #tpu.core_type<tc>, window_params = [{transform_indices = @transform_0, window_bounds = array<i64: 8, 8>}, {pipeline_mode = #tpu.pipeline_mode<synchronous>, transform_indices = @transform_1, window_bounds = array<i64: 8, 256>}, {pipeline_mode = #tpu.pipeline_mode<synchronous>, transform_indices = @transform_2, window_bounds = array<i64: 1, 256>}, {pipeline_mode = #tpu.pipeline_mode<synchronous>, transform_indices = @transform_3, window_bounds = array<i64: 256, 128>}, {pipeline_mode = #tpu.pipeline_mode<synchronous>, transform_indices = @transform_4, window_bounds = array<i64: 1, 128>}, {pipeline_mode = #tpu.pipeline_mode<synchronous>, transform_indices = @transform_5, window_bounds = array<i64: 128, 128>}, {pipeline_mode = #tpu.pipeline_mode<synchronous>, transform_indices = @transform_6, window_bounds = array<i64: 1, 128>}, {pipeline_mode = #tpu.pipeline_mode<synchronous>, transform_indices = @transform_7, window_bounds = array<i64: 128, 128>}, {pipeline_mode = #tpu.pipeline_mode<synchronous>, transform_indices = @transform_8, window_bounds = array<i64: 1, 128>}, {transform_indices = @transform_9, window_bounds = array<i64: 8, 128>}]} {
    %c0 = arith.constant 0 : index
    %c0_0 = arith.constant 0 : index
    %0 = vector.load %arg1[%c0, %c0_0] : memref<8x8xf32, #tpu.memory_space<vmem>>, vector<8x8xf32>
    %c0_1 = arith.constant 0 : index
    %c0_2 = arith.constant 0 : index
    %1 = vector.load %arg2[%c0_1, %c0_2] : memref<8x256xf32, #tpu.memory_space<vmem>>, vector<8x256xf32>
    %cst = arith.constant dense<0.000000e+00> : vector<8x256xf32>
    %2 = tpu.matmul %0, %1, %cst {dimension_numbers = #tpu.dot_dimension_numbers<[1], [0], [0], [1], [0, 0, 1, 1], [], []>} : vector<8x8xf32>, vector<8x256xf32>, vector<8x256xf32> -> vector<8x256xf32>
    %c0_3 = arith.constant 0 : index
    %c0_4 = arith.constant 0 : index
    %3 = vector.load %arg3[%c0_3, %c0_4] : memref<1x256xf32, #tpu.memory_space<vmem>>, vector<1x256xf32>
    %4 = vector.broadcast %3 : vector<1x256xf32> to vector<8x256xf32>
    %5 = arith.addf %2, %4 : vector<8x256xf32>
    %cst_5 = arith.constant 0.000000e+00 : f32
    %6 = vector.broadcast %cst_5 : f32 to vector<8x256xf32>
    %7 = arith.maximumf %5, %6 : vector<8x256xf32>
    %c0_6 = arith.constant 0 : index
    %c0_7 = arith.constant 0 : index
    %8 = vector.load %arg4[%c0_6, %c0_7] : memref<256x128xf32, #tpu.memory_space<vmem>>, vector<256x128xf32>
    %cst_8 = arith.constant dense<0.000000e+00> : vector<8x128xf32>
    %9 = tpu.matmul %7, %8, %cst_8 {dimension_numbers = #tpu.dot_dimension_numbers<[1], [0], [0], [1], [0, 0, 1, 1], [], []>} : vector<8x256xf32>, vector<256x128xf32>, vector<8x128xf32> -> vector<8x128xf32>
    %c0_9 = arith.constant 0 : index
    %c0_10 = arith.constant 0 : index
    %10 = vector.load %arg5[%c0_9, %c0_10] : memref<1x128xf32, #tpu.memory_space<vmem>>, vector<1x128xf32>
    %11 = vector.broadcast %10 : vector<1x128xf32> to vector<8x128xf32>
    %12 = arith.addf %9, %11 : vector<8x128xf32>
    %cst_11 = arith.constant 0.000000e+00 : f32
    %13 = vector.broadcast %cst_11 : f32 to vector<8x128xf32>
    %14 = arith.maximumf %12, %13 : vector<8x128xf32>
    %c0_12 = arith.constant 0 : index
    %c0_13 = arith.constant 0 : index
    %15 = vector.load %arg6[%c0_12, %c0_13] : memref<128x128xf32, #tpu.memory_space<vmem>>, vector<128x128xf32>
    %cst_14 = arith.constant dense<0.000000e+00> : vector<8x128xf32>
    %16 = tpu.matmul %14, %15, %cst_14 {dimension_numbers = #tpu.dot_dimension_numbers<[1], [0], [0], [1], [0, 0, 1, 1], [], []>} : vector<8x128xf32>, vector<128x128xf32>, vector<8x128xf32> -> vector<8x128xf32>
    %c0_15 = arith.constant 0 : index
    %c0_16 = arith.constant 0 : index
    %17 = vector.load %arg7[%c0_15, %c0_16] : memref<1x128xf32, #tpu.memory_space<vmem>>, vector<1x128xf32>
    %18 = vector.broadcast %17 : vector<1x128xf32> to vector<8x128xf32>
    %19 = arith.addf %16, %18 : vector<8x128xf32>
    %cst_17 = arith.constant 0.000000e+00 : f32
    %20 = vector.broadcast %cst_17 : f32 to vector<8x128xf32>
    %21 = arith.maximumf %19, %20 : vector<8x128xf32>
    %c0_18 = arith.constant 0 : index
    %c0_19 = arith.constant 0 : index
    %22 = vector.load %arg8[%c0_18, %c0_19] : memref<128x128xf32, #tpu.memory_space<vmem>>, vector<128x128xf32>
    %cst_20 = arith.constant dense<0.000000e+00> : vector<8x128xf32>
    %23 = tpu.matmul %21, %22, %cst_20 {dimension_numbers = #tpu.dot_dimension_numbers<[1], [0], [0], [1], [0, 0, 1, 1], [], []>} : vector<8x128xf32>, vector<128x128xf32>, vector<8x128xf32> -> vector<8x128xf32>
    %c0_21 = arith.constant 0 : index
    %c0_22 = arith.constant 0 : index
    %24 = vector.load %arg9[%c0_21, %c0_22] : memref<1x128xf32, #tpu.memory_space<vmem>>, vector<1x128xf32>
    %25 = vector.broadcast %24 : vector<1x128xf32> to vector<8x128xf32>
    %26 = arith.addf %23, %25 : vector<8x128xf32>
    %27 = tpu.iota {dimensions = array<i32: 1>} : vector<8x128xi32>
    %c0_i32 = arith.constant 0 : i32
    %28 = vector.broadcast %c0_i32 : i32 to vector<8x128xi32>
    %29 = arith.cmpi eq, %27, %28 : vector<8x128xi32>
    %30 = arith.extui %29 : vector<8x128xi1> to vector<8x128xi32>
    %31 = arith.sitofp %30 : vector<8x128xi32> to vector<8x128xf32>
    %c1_i32 = arith.constant 1 : i32
    %32 = vector.broadcast %c1_i32 : i32 to vector<8x128xi32>
    %33 = arith.cmpi sge, %27, %32 : vector<8x128xi32>
    %c5_i32 = arith.constant 5 : i32
    %34 = vector.broadcast %c5_i32 : i32 to vector<8x128xi32>
    %35 = arith.cmpi slt, %27, %34 : vector<8x128xi32>
    %36 = arith.andi %33, %35 : vector<8x128xi1>
    %37 = arith.extui %36 : vector<8x128xi1> to vector<8x128xi32>
    %38 = arith.sitofp %37 : vector<8x128xi32> to vector<8x128xf32>
    %39 = arith.mulf %26, %31 : vector<8x128xf32>
    %cst_23 = arith.constant dense<0.000000e+00> : vector<8xf32>
    %40 = vector.multi_reduction <add>, %39, %cst_23 [1] : vector<8x128xf32> to vector<8xf32>
    %41 = vector.shape_cast %40 : vector<8xf32> to vector<8x1xf32>
    %42 = arith.mulf %26, %38 : vector<8x128xf32>
    %cst_24 = arith.constant dense<0.000000e+00> : vector<8xf32>
    %43 = vector.multi_reduction <add>, %42, %cst_24 [1] : vector<8x128xf32> to vector<8xf32>
    %44 = vector.shape_cast %43 : vector<8xf32> to vector<8x1xf32>
    %cst_25 = arith.constant 2.500000e-01 : f32
    %45 = vector.broadcast %cst_25 : f32 to vector<8x1xf32>
    %46 = arith.mulf %44, %45 : vector<8x1xf32>
    %47 = vector.broadcast %41 : vector<8x1xf32> to vector<8x128xf32>
    %48 = arith.addf %47, %26 : vector<8x128xf32>
    %49 = vector.broadcast %46 : vector<8x1xf32> to vector<8x128xf32>
    %50 = arith.subf %48, %49 : vector<8x128xf32>
    %c0_26 = arith.constant 0 : index
    %c0_27 = arith.constant 0 : index
    %51 = vector.load %arg10[%c0_26, %c0_27] : memref<8x128xf32, #tpu.memory_space<vmem>>, vector<8x128xf32>
    tpu.vector_store %arg10[%c0_26, %c0_27], %50 {strides = array<i32>} : memref<8x128xf32, #tpu.memory_space<vmem>>, vector<8x128xf32>,
    return
  }
  func.func @transform_0(%arg0: i32) -> (i32, i32) {
    %c0_i32 = arith.constant 0 : i32
    %c0_i32_0 = arith.constant 0 : i32
    return %arg0, %c0_i32 : i32, i32
  }
  func.func @transform_1(%arg0: i32) -> (i32, i32) {
    %c0_i32 = arith.constant 0 : i32
    %c0_i32_0 = arith.constant 0 : i32
    %c0_i32_1 = arith.constant 0 : i32
    return %c0_i32, %c0_i32_0 : i32, i32
  }
  func.func @transform_2(%arg0: i32) -> (i32, i32) {
    %c0_i32 = arith.constant 0 : i32
    %c0_i32_0 = arith.constant 0 : i32
    %c0_i32_1 = arith.constant 0 : i32
    return %c0_i32, %c0_i32_0 : i32, i32
  }
  func.func @transform_3(%arg0: i32) -> (i32, i32) {
    %c0_i32 = arith.constant 0 : i32
    %c0_i32_0 = arith.constant 0 : i32
    %c0_i32_1 = arith.constant 0 : i32
    return %c0_i32, %c0_i32_0 : i32, i32
  }
  func.func @transform_4(%arg0: i32) -> (i32, i32) {
    %c0_i32 = arith.constant 0 : i32
    %c0_i32_0 = arith.constant 0 : i32
    %c0_i32_1 = arith.constant 0 : i32
    return %c0_i32, %c0_i32_0 : i32, i32
  }
  func.func @transform_5(%arg0: i32) -> (i32, i32) {
    %c0_i32 = arith.constant 0 : i32
    %c0_i32_0 = arith.constant 0 : i32
    %c0_i32_1 = arith.constant 0 : i32
    return %c0_i32, %c0_i32_0 : i32, i32
  }
  func.func @transform_6(%arg0: i32) -> (i32, i32) {
    %c0_i32 = arith.constant 0 : i32
    %c0_i32_0 = arith.constant 0 : i32
    %c0_i32_1 = arith.constant 0 : i32
    return %c0_i32, %c0_i32_0 : i32, i32
  }
  func.func @transform_7(%arg0: i32) -> (i32, i32) {
    %c0_i32 = arith.constant 0 : i32
    %c0_i32_0 = arith.constant 0 : i32
    %c0_i32_1 = arith.constant 0 : i32
    return %c0_i32, %c0_i32_0 : i32, i32
  }
  func.func @transform_8(%arg0: i32) -> (i32, i32) {
    %c0_i32 = arith.constant 0 : i32
    %c0_i32_0 = arith.constant 0 : i32
    %c0_i32_1 = arith.constant 0 : i32
    return %c0_i32, %c0_i32_0 : i32, i32
  }
  func.func @transform_9(%arg0: i32) -> (i32, i32) {
    %c0_i32 = arith.constant 0 : i32
    %c0_i32_0 = arith.constant 0 : i32
    return %arg0, %c0_i32 : i32, i32
  }
}

</mosaic_0001>

<llo_original>
// kernel: tpu_custom_call.1
$region0: #{tpu_custom_call.1}
  #allocation0 [shape = 'u32[]', space=smem, size = 0x4, offset = 0x4, fixed_abs, tag = 'smem constant byte address 0x4 - core index']
  #allocation1 [shape = 'u32[144,128]{1,0:T(1,128)}', space=vmem, size = 0x12000, scoped, tag = 'internal scratch']
  %s0 = inlined_call_operand.hbm [shape: f32[8,8], index: 0, kind: input, shape index: {}]
  %s1 = inlined_call_operand.hbm [shape: f32[8,256], index: 1, kind: input, shape index: {}]
  %s2 = inlined_call_operand.vmem [shape: f32[1,256], index: 2, kind: input, shape index: {}]
  %s3 = inlined_call_operand.hbm [shape: f32[256,128], index: 3, kind: input, shape index: {}]
  %s4 = inlined_call_operand.vmem [shape: f32[1,128], index: 4, kind: input, shape index: {}]
  %s5 = inlined_call_operand.hbm [shape: f32[128,128], index: 5, kind: input, shape index: {}]
  %s6 = inlined_call_operand.vmem [shape: f32[1,128], index: 6, kind: input, shape index: {}]
  %s7 = inlined_call_operand.hbm [shape: f32[128,128], index: 7, kind: input, shape index: {}]
  %s8 = inlined_call_operand.vmem [shape: f32[1,128], index: 8, kind: input, shape index: {}]
  %s9 = inlined_call_operand.hbm [shape: f32[8,128], index: 9, kind: output, shape index: {}]
  %s10 = sld [smem:[#allocation0]]
  $region66: #{tpu_custom_call.1} parent=0
    _
  %s12 = ssub.s32 1, %s10
  %s13 = scalar_select 0, %s12, %s10
  $region1: #{tpu_custom_call.1} parent=0
    #allocation2 [shape = 'u8[4096]{0}', space=vmem, size = 0x1000, scoped, tag = 'input window, operand 0, single buffered']
    #allocation3 [shape = 's32[1]{0}', space=sflag, size = 0x4, scoped, tag = 'scoped memory for tpu_custom_call.1']
    #allocation4 [shape = 's32[1]{0}', space=sflag, size = 0x4, scoped, tag = 'scoped memory for tpu_custom_call.1']
    #allocation5 [shape = 'u8[8192]{0}', space=vmem, size = 0x2000, scoped, tag = 'input window, operand 1, single buffered']
    #allocation6 [shape = 's32[1]{0}', space=sflag, size = 0x4, scoped, tag = 'scoped memory for tpu_custom_call.1']
    #allocation7 [shape = 'u8[131072]{0}', space=vmem, size = 0x20000, scoped, tag = 'input window, operand 3, single buffered']
    #allocation8 [shape = 'u8[65536]{0}', space=vmem, size = 0x10000, scoped, tag = 'input window, operand 5, single buffered']
    #allocation9 [shape = 's32[1]{0}', space=sflag, size = 0x4, scoped, tag = 'scoped memory for tpu_custom_call.1']
    #allocation10 [shape = 'u8[65536]{0}', space=vmem, size = 0x10000, scoped, tag = 'input window, operand 7, single buffered']
    #allocation11 [shape = 'u8[4096]{0}', space=vmem, size = 0x1000, scoped, tag = 'output window, operand 0, single buffered']
    %14 = vsyncpa [#allocation3], 0
    %15 = vsyncpa [#allocation6], 0
    %16 = vsyncpa [#allocation9], 0
    %17 = vsyncpa [#allocation4], 0
    // Predicated region
    $region2: #{tpu_custom_call.1} parent=1 // pred_check
      _
    $region3: #{tpu_custom_call.1} parent=1 // pred_check_branch
      %19 = sbr.rel (0) target = $region5
    $region4: #{tpu_custom_call.1} parent=1 // pred_region
      %s21 = ssub.s32 128, 128
      %22 = vsyncadd [#allocation3], %s21
      %s24 = sshll.u32 [#allocation2], 4
      %s25 = int_to_ptr.vmem [resolvable:$true] %s24
      %27 = dma.hbm_to_vmem [thread:$0]  %s0, 128, %s25, [#allocation3]
    $region5: #{tpu_custom_call.1} parent=1 // pred_fallthru
      _
    // Predicated region
    $region6: #{tpu_custom_call.1} parent=1 // pred_check
      _
    $region7: #{tpu_custom_call.1} parent=1 // pred_check_branch
      %29 = sbr.rel (0) target = $region9
    $region8: #{tpu_custom_call.1} parent=1 // pred_region
      %s31 = ssub.s32 256, 256
      %32 = vsyncadd [#allocation6], %s31
      %s34 = sshll.u32 [#allocation5], 4
      %s35 = int_to_ptr.vmem [resolvable:$true] %s34
      %37 = dma.hbm_to_vmem [thread:$0]  %s1, 256, %s35, [#allocation6]
    $region9: #{tpu_custom_call.1} parent=1 // pred_fallthru
      _
    // Predicated region
    $region10: #{tpu_custom_call.1} parent=1 // pred_check
      _
    $region11: #{tpu_custom_call.1} parent=1 // pred_check_branch
      %39 = sbr.rel (0) target = $region13
    $region12: #{tpu_custom_call.1} parent=1 // pred_region
      _
    $region13: #{tpu_custom_call.1} parent=1 // pred_fallthru
      _
    // Predicated region
    $region14: #{tpu_custom_call.1} parent=1 // pred_check
      _
    $region15: #{tpu_custom_call.1} parent=1 // pred_check_branch
      %41 = sbr.rel (0) target = $region17
    $region16: #{tpu_custom_call.1} parent=1 // pred_region
      %s43 = ssub.s32 4096, 4096
      %44 = vsyncadd [#allocation6], %s43
      %s45 = sshll.u32 [#allocation7], 4
      %s46 = int_to_ptr.vmem [resolvable:$true] %s45
      %51 = dma.hbm_to_vmem [thread:$0]  %s3, 4096, %s46, [#allocation6], 128, 128, 8
    $region17: #{tpu_custom_call.1} parent=1 // pred_fallthru
      _
    // Predicated region
    $region18: #{tpu_custom_call.1} parent=1 // pred_check
      _
    $region19: #{tpu_custom_call.1} parent=1 // pred_check_branch
      %53 = sbr.rel (0) target = $region21
    $region20: #{tpu_custom_call.1} parent=1 // pred_region
      _
    $region21: #{tpu_custom_call.1} parent=1 // pred_fallthru
      _
    // Predicated region
    $region22: #{tpu_custom_call.1} parent=1 // pred_check
      _
    $region23: #{tpu_custom_call.1} parent=1 // pred_check_branch
      %55 = sbr.rel (0) target = $region25
    $region24: #{tpu_custom_call.1} parent=1 // pred_region
      %s57 = ssub.s32 2048, 2048
      %58 = vsyncadd [#allocation9], %s57
      %s59 = sshll.u32 [#allocation8], 4
      %s60 = int_to_ptr.vmem [resolvable:$true] %s59
      %65 = dma.hbm_to_vmem [thread:$0]  %s5, 2048, %s60, [#allocation9], 128, 128, 8
    $region25: #{tpu_custom_call.1} parent=1 // pred_fallthru
      _
    // Predicated region
    $region26: #{tpu_custom_call.1} parent=1 // pred_check
      _
    $region27: #{tpu_custom_call.1} parent=1 // pred_check_branch
      %67 = sbr.rel (0) target = $region29
    $region28: #{tpu_custom_call.1} parent=1 // pred_region
      _
    $region29: #{tpu_custom_call.1} parent=1 // pred_fallthru
      _
    // Predicated region
    $region30: #{tpu_custom_call.1} parent=1 // pred_check
      _
    $region31: #{tpu_custom_call.1} parent=1 // pred_check_branch
      %69 = sbr.rel (0) target = $region33
    $region32: #{tpu_custom_call.1} parent=1 // pred_region
      %s71 = ssub.s32 2048, 2048
      %72 = vsyncadd [#allocation9], %s71
      %s73 = sshll.u32 [#allocation10], 4
      %s74 = int_to_ptr.vmem [resolvable:$true] %s73
      %79 = dma.hbm_to_vmem [thread:$0]  %s7, 2048, %s74, [#allocation9], 128, 128, 8
    $region33: #{tpu_custom_call.1} parent=1 // pred_fallthru
      _
    // Predicated region
    $region34: #{tpu_custom_call.1} parent=1 // pred_check
      _
    $region35: #{tpu_custom_call.1} parent=1 // pred_check_branch
      %81 = sbr.rel (0) target = $region37
    $region36: #{tpu_custom_call.1} parent=1 // pred_region
      _
    $region37: #{tpu_custom_call.1} parent=1 // pred_fallthru
      _
    // Predicated region
    $region38: #{tpu_custom_call.1} parent=1 // pred_check
      _
    $region39: #{tpu_custom_call.1} parent=1 // pred_check_branch
      %83 = sbr.rel (0) target = $region41
    $region40: #{tpu_custom_call.1} parent=1 // pred_region
      %84 = dma.done [#allocation3], 128
    $region41: #{tpu_custom_call.1} parent=1 // pred_fallthru
      _
    // Predicated region
    $region42: #{tpu_custom_call.1} parent=1 // pred_check
      _
    $region43: #{tpu_custom_call.1} parent=1 // pred_check_branch
      %86 = sbr.rel (0) target = $region45
    $region44: #{tpu_custom_call.1} parent=1 // pred_region
      %87 = dma.done [#allocation6], 256
    $region45: #{tpu_custom_call.1} parent=1 // pred_fallthru
      _
    // Predicated region
    $region46: #{tpu_custom_call.1} parent=1 // pred_check
      _
    $region47: #{tpu_custom_call.1} parent=1 // pred_check_branch
      %89 = sbr.rel (0) target = $region49
    $region48: #{tpu_custom_call.1} parent=1 // pred_region
      %90 = dma.done [#allocation6], 4096
    $region49: #{tpu_custom_call.1} parent=1 // pred_fallthru
      _
    // Predicated region
    $region50: #{tpu_custom_call.1} parent=1 // pred_check
      _
    $region51: #{tpu_custom_call.1} parent=1 // pred_check_branch
      %92 = sbr.rel (0) target = $region53
    $region52: #{tpu_custom_call.1} parent=1 // pred_region
      %93 = dma.done [#allocation9], 2048
    $region53: #{tpu_custom_call.1} parent=1 // pred_fallthru
      _
    // Predicated region
    $region54: #{tpu_custom_call.1} parent=1 // pred_check
      _
    $region55: #{tpu_custom_call.1} parent=1 // pred_check_branch
      %95 = sbr.rel (0) target = $region57
    $region56: #{tpu_custom_call.1} parent=1 // pred_region
      %96 = dma.done [#allocation9], 2048
    $region57: #{tpu_custom_call.1} parent=1 // pred_fallthru
      _
    %v97 = vld [vmem:[#allocation2] sm:$0xff]
    %v98 = vld [vmem:[#allocation5] sm:$0xff]
    %v99 = vld [vmem:[#allocation5 + $0x8] sm:$0xff]
    %v100 = vld [vmem:[%s2] sm:$0x3]
    %v102 = vlaneseq
    %v103 = vshrl.u32 %v102, 7
    %v104 = vsub.s32 0, %v103
    %v105 = vrot.slane %v100, %v104
    %v106 = vlaneseq
    %v107 = vshrl.u32 %v106, 7
    %v108 = vsub.s32 1, %v107
    %v109 = vrot.slane %v100, %v108
    %vm112 = vcmask 64512
    %v114 = vsel %vm112, %v97, 0
    %116 = vmatprep.subr.mxu0 %v99
    %117 = vmatpush1.msra.mxu0 %v98
    %118 = vmatprep.subr.mxu0 0.0
    %119 = vmatpush1.msra.mxu0 0.0
    %120 = vmatprep.subr.mxu0 0.0
    %121 = vmatpush1.msra.mxu0 0.0
    %122 = vmatprep.subr.mxu0 0.0
    %123 = vmatpush1.msra.mxu0 0.0
    %124 = vmatprep.subr.mxu0 0.0
    %125 = vmatpush1.msra.mxu0 0.0
    %126 = vmatprep.subr.mxu0 0.0
    %127 = vmatpush1.msra.mxu0 0.0
    %128 = vmatprep.subr.mxu0 0.0
    %129 = vmatpush1.msra.mxu0 0.0
    %130 = vmatprep.subr.mxu0 0.0
    %131 = vmatpush1.msra.mxu0 0.0
    %132 = vmatprep.subr.mxu0 0.0
    %133 = vmatpush1.msra.mxu0 0.0
    %134 = vmatprep.subr.mxu0 0.0
    %135 = vmatpush1.msra.mxu0 0.0
    %136 = vmatprep.subr.mxu0 0.0
    %137 = vmatpush1.msra.mxu0 0.0
    %138 = vmatprep.subr.mxu0 0.0
    %139 = vmatpush1.msra.mxu0 0.0
    %140 = vmatprep.subr.mxu0 0.0
    %141 = vmatpush1.msra.mxu0 0.0
    %142 = vmatprep.subr.mxu0 0.0
    %143 = vmatpush1.msra.mxu0 0.0
    %144 = vmatprep.subr.mxu0 0.0
    %145 = vmatpush1.msra.mxu0 0.0
    %146 = vmatprep.subr.mxu0 0.0
    %147 = vmatpush1.msra.mxu0 0.0
    %148 = vmatprep.subr.mxu0 0.0
    %149 = vmatpush1.msra.mxu0 0.0
    %150 = vmatprep.subr.mxu0 0.0
    %151 = vmatpush1.msra.mxu0 0.0
    %152 = vmatprep.subr.mxu0 0.0
    %153 = vmatpush1.msra.mxu0 0.0
    %154 = vmatprep.subr.mxu0 0.0
    %155 = vmatpush1.msra.mxu0 0.0
    %156 = vmatprep.subr.mxu0 0.0
    %157 = vmatpush1.msra.mxu0 0.0
    %158 = vmatprep.subr.mxu0 0.0
    %159 = vmatpush1.msra.mxu0 0.0
    %160 = vmatprep.subr.mxu0 0.0
    %161 = vmatpush1.msra.mxu0 0.0
    %162 = vmatprep.subr.mxu0 0.0
    %163 = vmatpush1.msra.mxu0 0.0
    %164 = vmatprep.subr.mxu0 0.0
    %165 = vmatpush1.msra.mxu0 0.0
    %166 = vmatprep.subr.mxu0 0.0
    %167 = vmatpush1.msra.mxu0 0.0
    %168 = vmatprep.subr.mxu0 0.0
    %169 = vmatpush1.msra.mxu0 0.0
    %170 = vmatprep.subr.mxu0 0.0
    %171 = vmatpush1.msra.mxu0 0.0
    %172 = vmatprep.subr.mxu0 0.0
    %173 = vmatpush1.msra.mxu0 0.0
    %174 = vmatprep.subr.mxu0 0.0
    %175 = vmatpush1.msra.mxu0 0.0
    %176 = vmatprep.subr.mxu0 0.0
    %177 = vmatpush1.msra.mxu0 0.0
    %178 = vmatprep.subr.mxu0 0.0
    %179 = vmatpush1.msra.mxu0 0.0
    %180 = vmatprep.mubr.f32.mxu0 0.0
    %181 = vmatmul.mubr.f32.gmra.mrb[0].mxu0 %v114
    %v182 = vpop.f32.mrb[0].mxu0
    %v183 = vadd.f32 %v105, %v182
    %v184 = vpop.f32.mrb[0].mxu0
    %v185 = vadd.f32 %v109, %v184
    %186 = vdwg.mxu0
    %v187 = vmax.f32 %v183, 0.0
    %v188 = vmax.f32 %v185, 0.0
    %v189 = vld [vmem:[#allocation7] sm:$0xff]
    %v190 = vld [vmem:[#allocation7 + $0x8] sm:$0xff]
    %v191 = vld [vmem:[#allocation7 + $0x10] sm:$0xff]
    %v192 = vld [vmem:[#allocation7 + $0x18] sm:$0xff]
    %v193 = vld [vmem:[#allocation7 + $0x20] sm:$0xff]
    %v194 = vld [vmem:[#allocation7 + $0x28] sm:$0xff]
    %v195 = vld [vmem:[#allocation7 + $0x30] sm:$0xff]
    %v196 = vld [vmem:[#allocation7 + $0x38] sm:$0xff]
    %v197 = vld [vmem:[#allocation7 + $0x40] sm:$0xff]
    %v198 = vld [vmem:[#allocation7 + $0x48] sm:$0xff]
    %v199 = vld [vmem:[#allocation7 + $0x50] sm:$0xff]
    %v200 = vld [vmem:[#allocation7 + $0x58] sm:$0xff]
    %v201 = vld [vmem:[#allocation7 + $0x60] sm:$0xff]
    %v202 = vld [vmem:[#allocation7 + $0x68] sm:$0xff]
    %v203 = vld [vmem:[#allocation7 + $0x70] sm:$0xff]
    %v204 = vld [vmem:[#allocation7 + $0x78] sm:$0xff]
    %v205 = vld [vmem:[#allocation7 + $0x80] sm:$0xff]
    %v206 = vld [vmem:[#allocation7 + $0x88] sm:$0xff]
    %v207 = vld [vmem:[#allocation7 + $0x90] sm:$0xff]
    %v208 = vld [vmem:[#allocation7 + $0x98] sm:$0xff]
    %v209 = vld [vmem:[#allocation7 + $0xa0] sm:$0xff]
    %v210 = vld [vmem:[#allocation7 + $0xa8] sm:$0xff]
    %v211 = vld [vmem:[#allocation7 + $0xb0] sm:$0xff]
    %v212 = vld [vmem:[#allocation7 + $0xb8] sm:$0xff]
    %v213 = vld [vmem:[#allocation7 + $0xc0] sm:$0xff]
    %v214 = vld [vmem:[#allocation7 + $0xc8] sm:$0xff]
    %v215 = vld [vmem:[#allocation7 + $0xd0] sm:$0xff]
    %v216 = vld [vmem:[#allocation7 + $0xd8] sm:$0xff]
    %v217 = vld [vmem:[#allocation7 + $0xe0] sm:$0xff]
    %v218 = vld [vmem:[#allocation7 + $0xe8] sm:$0xff]
    %v219 = vld [vmem:[#allocation7 + $0xf0] sm:$0xff]
    %v220 = vld [vmem:[#allocation7 + $0xf8] sm:$0xff]
    %v221 = vld [vmem:[%s4] sm:$0x1]
    %v223 = vlaneseq
    %v224 = vshrl.u32 %v223, 7
    %v225 = vsub.s32 0, %v224
    %v226 = vrot.slane %v221, %v225
    %228 = vmatprep.subr.mxu0 0.0
    %229 = vmatpush1.msra.mxu0 %v189
    %230 = vmatprep.subr.mxu0 0.0
    %231 = vmatpush1.msra.mxu0 %v190
    %232 = vmatprep.subr.mxu0 0.0
    %233 = vmatpush1.msra.mxu0 %v191
    %234 = vmatprep.subr.mxu0 0.0
    %235 = vmatpush1.msra.mxu0 %v192
    %236 = vmatprep.subr.mxu0 0.0
    %237 = vmatpush1.msra.mxu0 %v193
    %238 = vmatprep.subr.mxu0 0.0
    %239 = vmatpush1.msra.mxu0 %v194
    %240 = vmatprep.subr.mxu0 0.0
    %241 = vmatpush1.msra.mxu0 %v195
    %242 = vmatprep.subr.mxu0 0.0
    %243 = vmatpush1.msra.mxu0 %v196
    %244 = vmatprep.subr.mxu0 0.0
    %245 = vmatpush1.msra.mxu0 %v197
    %246 = vmatprep.subr.mxu0 0.0
    %247 = vmatpush1.msra.mxu0 %v198
    %248 = vmatprep.subr.mxu0 0.0
    %249 = vmatpush1.msra.mxu0 %v199
    %250 = vmatprep.subr.mxu0 0.0
    %251 = vmatpush1.msra.mxu0 %v200
    %252 = vmatprep.subr.mxu0 0.0
    %253 = vmatpush1.msra.mxu0 %v201
    %254 = vmatprep.subr.mxu0 0.0
    %255 = vmatpush1.msra.mxu0 %v202
    %256 = vmatprep.subr.mxu0 0.0
    %257 = vmatpush1.msra.mxu0 %v203
    %258 = vmatprep.subr.mxu0 0.0
    %259 = vmatpush1.msra.mxu0 %v204
    %260 = vmatprep.subr.mxu0 0.0
    %261 = vmatpush1.msra.mxu0 %v205
    %262 = vmatprep.subr.mxu0 0.0
    %263 = vmatpush1.msra.mxu0 %v206
    %264 = vmatprep.subr.mxu0 0.0
    %265 = vmatpush1.msra.mxu0 %v207
    %266 = vmatprep.subr.mxu0 0.0
    %267 = vmatpush1.msra.mxu0 %v208
    %268 = vmatprep.subr.mxu0 0.0
    %269 = vmatpush1.msra.mxu0 %v209
    %270 = vmatprep.subr.mxu0 0.0
    %271 = vmatpush1.msra.mxu0 %v210
    %272 = vmatprep.subr.mxu0 0.0
    %273 = vmatpush1.msra.mxu0 %v211
    %274 = vmatprep.subr.mxu0 0.0
    %275 = vmatpush1.msra.mxu0 %v212
    %276 = vmatprep.subr.mxu0 0.0
    %277 = vmatpush1.msra.mxu0 %v213
    %278 = vmatprep.subr.mxu0 0.0
    %279 = vmatpush1.msra.mxu0 %v214
    %280 = vmatprep.subr.mxu0 0.0
    %281 = vmatpush1.msra.mxu0 %v215
    %282 = vmatprep.subr.mxu0 0.0
    %283 = vmatpush1.msra.mxu0 %v216
    %284 = vmatprep.subr.mxu0 0.0
    %285 = vmatpush1.msra.mxu0 %v217
    %286 = vmatprep.subr.mxu0 0.0
    %287 = vmatpush1.msra.mxu0 %v218
    %288 = vmatprep.subr.mxu0 0.0
    %289 = vmatpush1.msra.mxu0 %v219
    %290 = vmatprep.subr.mxu0 0.0
    %291 = vmatpush1.msra.mxu0 %v220
    %292 = vmatprep.mubr.f32.mxu0 %v188
    %293 = vmatmul.mubr.f32.gmra.mrb[0].mxu0 %v187
    %v294 = vpop.f32.mrb[0].mxu0
    %v295 = vadd.f32 %v226, %v294
    %v296 = vpop.f32.mrb[0].mxu0
    %297 = vdwg.mxu0
    %v298 = vmax.f32 %v295, 0.0
    %v299 = vld [vmem:[#allocation8] sm:$0xff]
    %v300 = vld [vmem:[#allocation8 + $0x8] sm:$0xff]
    %v301 = vld [vmem:[#allocation8 + $0x10] sm:$0xff]
    %v302 = vld [vmem:[#allocation8 + $0x18] sm:$0xff]
    %v303 = vld [vmem:[#allocation8 + $0x20] sm:$0xff]
    %v304 = vld [vmem:[#allocation8 + $0x28] sm:$0xff]
    %v305 = vld [vmem:[#allocation8 + $0x30] sm:$0xff]
    %v306 = vld [vmem:[#allocation8 + $0x38] sm:$0xff]
    %v307 = vld [vmem:[#allocation8 + $0x40] sm:$0xff]
    %v308 = vld [vmem:[#allocation8 + $0x48] sm:$0xff]
    %v309 = vld [vmem:[#allocation8 + $0x50] sm:$0xff]
    %v310 = vld [vmem:[#allocation8 + $0x58] sm:$0xff]
    %v311 = vld [vmem:[#allocation8 + $0x60] sm:$0xff]
    %v312 = vld [vmem:[#allocation8 + $0x68] sm:$0xff]
    %v313 = vld [vmem:[#allocation8 + $0x70] sm:$0xff]
    %v314 = vld [vmem:[#allocation8 + $0x78] sm:$0xff]
    %v315 = vld [vmem:[%s6] sm:$0x1]
    %v317 = vlaneseq
    %v318 = vshrl.u32 %v317, 7
    %v319 = vsub.s32 0, %v318
    %v320 = vrot.slane %v315, %v319
    %322 = vmatprep.subr.mxu0 0.0
    %323 = vmatpush1.msra.mxu0 %v299
    %324 = vmatprep.subr.mxu0 0.0
    %325 = vmatpush1.msra.mxu0 %v300
    %326 = vmatprep.subr.mxu0 0.0
    %327 = vmatpush1.msra.mxu0 %v301
    %328 = vmatprep.subr.mxu0 0.0
    %329 = vmatpush1.msra.mxu0 %v302
    %330 = vmatprep.subr.mxu0 0.0
    %331 = vmatpush1.msra.mxu0 %v303
    %332 = vmatprep.subr.mxu0 0.0
    %333 = vmatpush1.msra.mxu0 %v304
    %334 = vmatprep.subr.mxu0 0.0
    %335 = vmatpush1.msra.mxu0 %v305
    %336 = vmatprep.subr.mxu0 0.0
    %337 = vmatpush1.msra.mxu0 %v306
    %338 = vmatprep.subr.mxu0 0.0
    %339 = vmatpush1.msra.mxu0 %v307
    %340 = vmatprep.subr.mxu0 0.0
    %341 = vmatpush1.msra.mxu0 %v308
    %342 = vmatprep.subr.mxu0 0.0
    %343 = vmatpush1.msra.mxu0 %v309
    %344 = vmatprep.subr.mxu0 0.0
    %345 = vmatpush1.msra.mxu0 %v310
    %346 = vmatprep.subr.mxu0 0.0
    %347 = vmatpush1.msra.mxu0 %v311
    %348 = vmatprep.subr.mxu0 0.0
    %349 = vmatpush1.msra.mxu0 %v312
    %350 = vmatprep.subr.mxu0 0.0
    %351 = vmatpush1.msra.mxu0 %v313
    %352 = vmatprep.subr.mxu0 0.0
    %353 = vmatpush1.msra.mxu0 %v314
    %354 = vmatprep.subr.mxu0 0.0
    %355 = vmatpush1.msra.mxu0 0.0
    %356 = vmatprep.subr.mxu0 0.0
    %357 = vmatpush1.msra.mxu0 0.0
    %358 = vmatprep.subr.mxu0 0.0
    %359 = vmatpush1.msra.mxu0 0.0
    %360 = vmatprep.subr.mxu0 0.0
    %361 = vmatpush1.msra.mxu0 0.0
    %362 = vmatprep.subr.mxu0 0.0
    %363 = vmatpush1.msra.mxu0 0.0
    %364 = vmatprep.subr.mxu0 0.0
    %365 = vmatpush1.msra.mxu0 0.0
    %366 = vmatprep.subr.mxu0 0.0
    %367 = vmatpush1.msra.mxu0 0.0
    %368 = vmatprep.subr.mxu0 0.0
    %369 = vmatpush1.msra.mxu0 0.0
    %370 = vmatprep.subr.mxu0 0.0
    %371 = vmatpush1.msra.mxu0 0.0
    %372 = vmatprep.subr.mxu0 0.0
    %373 = vmatpush1.msra.mxu0 0.0
    %374 = vmatprep.subr.mxu0 0.0
    %375 = vmatpush1.msra.mxu0 0.0
    %376 = vmatprep.subr.mxu0 0.0
    %377 = vmatpush1.msra.mxu0 0.0
    %378 = vmatprep.subr.mxu0 0.0
    %379 = vmatpush1.msra.mxu0 0.0
    %380 = vmatprep.subr.mxu0 0.0
    %381 = vmatpush1.msra.mxu0 0.0
    %382 = vmatprep.subr.mxu0 0.0
    %383 = vmatpush1.msra.mxu0 0.0
    %384 = vmatprep.subr.mxu0 0.0
    %385 = vmatpush1.msra.mxu0 0.0
    %386 = vmatprep.mubr.f32.mxu0 0.0
    %387 = vmatmul.mubr.f32.gmra.mrb[0].mxu0 %v298
    %v388 = vpop.f32.mrb[0].mxu0
    %v389 = vadd.f32 %v320, %v388
    %v390 = vpop.f32.mrb[0].mxu0
    %391 = vdwg.mxu0
    %v392 = vmax.f32 %v389, 0.0
    %v393 = vld [vmem:[#allocation10] sm:$0xff]
    %v394 = vld [vmem:[#allocation10 + $0x8] sm:$0xff]
    %v395 = vld [vmem:[#allocation10 + $0x10] sm:$0xff]
    %v396 = vld [vmem:[#allocation10 + $0x18] sm:$0xff]
    %v397 = vld [vmem:[#allocation10 + $0x20] sm:$0xff]
    %v398 = vld [vmem:[#allocation10 + $0x28] sm:$0xff]
    %v399 = vld [vmem:[#allocation10 + $0x30] sm:$0xff]
    %v400 = vld [vmem:[#allocation10 + $0x38] sm:$0xff]
    %v401 = vld [vmem:[#allocation10 + $0x40] sm:$0xff]
    %v402 = vld [vmem:[#allocation10 + $0x48] sm:$0xff]
    %v403 = vld [vmem:[#allocation10 + $0x50] sm:$0xff]
    %v404 = vld [vmem:[#allocation10 + $0x58] sm:$0xff]
    %v405 = vld [vmem:[#allocation10 + $0x60] sm:$0xff]
    %v406 = vld [vmem:[#allocation10 + $0x68] sm:$0xff]
    %v407 = vld [vmem:[#allocation10 + $0x70] sm:$0xff]
    %v408 = vld [vmem:[#allocation10 + $0x78] sm:$0xff]
    %v409 = vld [vmem:[%s8] sm:$0x1]
    %v411 = vlaneseq
    %v412 = vshrl.u32 %v411, 7
    %v413 = vsub.s32 0, %v412
    %v414 = vrot.slane %v409, %v413
    %416 = vmatprep.subr.mxu0 0.0
    %417 = vmatpush1.msra.mxu0 %v393
    %418 = vmatprep.subr.mxu0 0.0
    %419 = vmatpush1.msra.mxu0 %v394
    %420 = vmatprep.subr.mxu0 0.0
    %421 = vmatpush1.msra.mxu0 %v395
    %422 = vmatprep.subr.mxu0 0.0
    %423 = vmatpush1.msra.mxu0 %v396
    %424 = vmatprep.subr.mxu0 0.0
    %425 = vmatpush1.msra.mxu0 %v397
    %426 = vmatprep.subr.mxu0 0.0
    %427 = vmatpush1.msra.mxu0 %v398
    %428 = vmatprep.subr.mxu0 0.0
    %429 = vmatpush1.msra.mxu0 %v399
    %430 = vmatprep.subr.mxu0 0.0
    %431 = vmatpush1.msra.mxu0 %v400
    %432 = vmatprep.subr.mxu0 0.0
    %433 = vmatpush1.msra.mxu0 %v401
    %434 = vmatprep.subr.mxu0 0.0
    %435 = vmatpush1.msra.mxu0 %v402
    %436 = vmatprep.subr.mxu0 0.0
    %437 = vmatpush1.msra.mxu0 %v403
    %438 = vmatprep.subr.mxu0 0.0
    %439 = vmatpush1.msra.mxu0 %v404
    %440 = vmatprep.subr.mxu0 0.0
    %441 = vmatpush1.msra.mxu0 %v405
    %442 = vmatprep.subr.mxu0 0.0
    %443 = vmatpush1.msra.mxu0 %v406
    %444 = vmatprep.subr.mxu0 0.0
    %445 = vmatpush1.msra.mxu0 %v407
    %446 = vmatprep.subr.mxu0 0.0
    %447 = vmatpush1.msra.mxu0 %v408
    %448 = vmatprep.subr.mxu0 0.0
    %449 = vmatpush1.msra.mxu0 0.0
    %450 = vmatprep.subr.mxu0 0.0
    %451 = vmatpush1.msra.mxu0 0.0
    %452 = vmatprep.subr.mxu0 0.0
    %453 = vmatpush1.msra.mxu0 0.0
    %454 = vmatprep.subr.mxu0 0.0
    %455 = vmatpush1.msra.mxu0 0.0
    %456 = vmatprep.subr.mxu0 0.0
    %457 = vmatpush1.msra.mxu0 0.0
    %458 = vmatprep.subr.mxu0 0.0
    %459 = vmatpush1.msra.mxu0 0.0
    %460 = vmatprep.subr.mxu0 0.0
    %461 = vmatpush1.msra.mxu0 0.0
    %462 = vmatprep.subr.mxu0 0.0
    %463 = vmatpush1.msra.mxu0 0.0
    %464 = vmatprep.subr.mxu0 0.0
    %465 = vmatpush1.msra.mxu0 0.0
    %466 = vmatprep.subr.mxu0 0.0
    %467 = vmatpush1.msra.mxu0 0.0
    %468 = vmatprep.subr.mxu0 0.0
    %469 = vmatpush1.msra.mxu0 0.0
    %470 = vmatprep.subr.mxu0 0.0
    %471 = vmatpush1.msra.mxu0 0.0
    %472 = vmatprep.subr.mxu0 0.0
    %473 = vmatpush1.msra.mxu0 0.0
    %474 = vmatprep.subr.mxu0 0.0
    %475 = vmatpush1.msra.mxu0 0.0
    %476 = vmatprep.subr.mxu0 0.0
    %477 = vmatpush1.msra.mxu0 0.0
    %478 = vmatprep.subr.mxu0 0.0
    %479 = vmatpush1.msra.mxu0 0.0
    %480 = vmatprep.mubr.f32.mxu0 0.0
    %481 = vmatmul.mubr.f32.gmra.mrb[0].mxu0 %v392
    %v482 = vpop.f32.mrb[0].mxu0
    %v483 = vadd.f32 %v414, %v482
    %v484 = vpop.f32.mrb[0].mxu0
    %485 = vdwg.mxu0
    %v486 = vlaneseq
    %v487 = vand.u32 %v486, 127
    %vm488 = vcmp.eq.s32.totalorder %v487, 0
    %v489 = vsel %vm488, 1, 0
    %v490 = vcvt.s32.f32 %v489
    %vm491 = vcmp.ge.s32.totalorder %v487, 1
    %vm492 = vcmp.lt.s32.totalorder %v487, 5
    %vm493 = vmand %vm491, %vm492
    %v494 = vsel %vm493, 1, 0
    %v495 = vcvt.s32.f32 %v494
    %v496 = vmul.f32 %v483, %v490
    %497 = vadd.xlane.f32.xlu0 %v496
    %v498 = vpop.xlane.xlu0 %497
    %v499 = vmul.f32 %v483, %v495
    %500 = vadd.xlane.f32.xlu0 %v499
    %v501 = vpop.xlane.xlu0 %500
    %v502 = vmul.f32 %v501, 0.25
    %v503 = vadd.f32 %v498, %v483
    %v504 = vsub.f32 %v503, %v502
    %505 = vst [vmem:[#allocation11] sm:$0xff] %v504
    // Predicated region
    $region58: #{tpu_custom_call.1} parent=1 // pred_check
      _
    $region59: #{tpu_custom_call.1} parent=1 // pred_check_branch
      %507 = sbr.rel (0) target = $region61
    $region60: #{tpu_custom_call.1} parent=1 // pred_region
      %s509 = ssub.s32 128, 128
      %510 = vsyncadd [#allocation4], %s509
      %s512 = sshll.u32 [#allocation11], 4
      %s513 = int_to_ptr.vmem [resolvable:$true] %s512
      %515 = dma.vmem_to_hbm [thread:$0]  %s513, 128, %s9, [#allocation4]
    $region61: #{tpu_custom_call.1} parent=1 // pred_fallthru
      _
    // Predicated region
    $region62: #{tpu_custom_call.1} parent=1 // pred_check
      _
    $region63: #{tpu_custom_call.1} parent=1 // pred_check_branch
      %517 = sbr.rel (0) target = $region65
    $region64: #{tpu_custom_call.1} parent=1 // pred_region
      %518 = dma.done [#allocation4], 128
    $region65: #{tpu_custom_call.1} parent=1 // pred_fallthru
      _
    %519 = vsyncpa [#allocation3], 1
    %520 = vsyncpa [#allocation6], 1
    %521 = vsyncpa [#allocation9], 1
    %522 = vsyncpa [#allocation4], 1

</llo_original>
